<compile_context>
chip_gen: v7x
topology: tpu7x:2x2x1
jax: 0.10.0
libtpu: 0.0.40
codegen_flags: <defaults>
</compile_context>

<pallas_src>
import functools

import jax
import jax.numpy as jnp
from jax.experimental import pallas as pl
from jax.experimental.pallas import tpu as pltpu


def _conv1d_kernel(x_ref, w_ref, b_ref, o_ref, xpad_ref, *,
                   padding, dilation, w_extra):
    # x_ref   : (1, T, C_in)          unpadded input sequence for one batch elem
    # w_ref   : (K*C_in, C_out)       im2col-flattened weights (compute dtype)
    # b_ref   : (1, C_out)            bias (f32)
    # o_ref   : (1, tT, C_out)        output tile
    # xpad_ref: (nT*tT + w_extra, C_in) zero-padded copy of the sequence (scratch)
    T = x_ref.shape[1]
    C_in = x_ref.shape[2]
    tT = o_ref.shape[1]
    K = w_ref.shape[0] // C_in
    xpad_rows = xpad_ref.shape[0]
    cdtype = xpad_ref.dtype

    t = pl.program_id(1)

    # Build the zero-padded sequence in VMEM once per batch element (folds the
    # conv's zero padding into the kernel instead of a jnp.pad HBM pass).
    @pl.when(t == 0)
    def _fill_padded_sequence():
        if padding > 0:
            xpad_ref[pl.ds(0, padding), :] = jnp.zeros((padding, C_in), cdtype)
        tail = xpad_rows - (padding + T)
        if tail > 0:
            xpad_ref[pl.ds(padding + T, tail), :] = jnp.zeros((tail, C_in), cdtype)
        xpad_ref[pl.ds(padding, T), :] = x_ref[0].astype(cdtype)

    # Window of padded input rows feeding this output tile.  Starts are
    # 16-aligned whenever the time axis is actually tiled (tT % 16 == 0).
    t0 = t * tT
    if tT % 16 == 0:
        t0 = pl.multiple_of(t0, 16)
    elif tT % 8 == 0:
        t0 = pl.multiple_of(t0, 8)
    W_load = tT + w_extra
    window = xpad_ref[pl.ds(t0, W_load), :]            # (W_load, C_in)

    # im2col: concatenate the K dilated tap views (static slices of the
    # already-loaded window) along lanes -> ONE MXU matmul, f32 accumulation.
    if K == 1:
        cols = window[:tT, :]
    else:
        cols = jnp.concatenate(
            [window[k * dilation:k * dilation + tT, :] for k in range(K)],
            axis=1)                                     # (tT, K*C_in)

    acc = jnp.dot(cols, w_ref[...], preferred_element_type=jnp.float32)
    # Bias folded into the same pass; single output store (no VMEM accumulator).
    o_ref[0] = (acc + b_ref[...]).astype(o_ref.dtype)


def conv_forward(x, weight, bias, *, padding=0, stride=1, dilation=1,
                 t_tile=512, compute_dtype=jnp.bfloat16):
    """Forward pass of the FastSpeech2 `Conv` module.

    x      : (B, T, C_in)
    weight : (C_out, C_in, K)   (PyTorch Conv1d weight layout)
    bias   : (C_out,) or None
    returns: (B, T_out, C_out) in x.dtype

    compute_dtype=jnp.bfloat16 casts operands inside the kernel (f32 MXU
    accumulation); pass jnp.float32 for strict parity with PyTorch f32 Conv1d.
    """
    assert stride == 1, "only stride=1 supported"
    B, T, C_in = x.shape
    C_out, C_in_w, K = weight.shape
    assert C_in_w == C_in

    halo = dilation * (K - 1)
    T_out = T + 2 * padding - halo
    assert T_out > 0, "empty output"

    if compute_dtype is None:
        compute_dtype = x.dtype
    c_itemsize = jnp.dtype(compute_dtype).itemsize
    x_itemsize = jnp.dtype(x.dtype).itemsize

    try:
        vmem_cap = pltpu.get_tpu_info().vmem_capacity_bytes
    except Exception:  # conservative fallback if the query is unavailable
        vmem_cap = 64 * 1024 * 1024

    # Time tile: multiple of 16 (bf16 sublane packing).  Keep the same default
    # on every generation -- halving it on v7x saves no VMEM (pressure comes
    # from the full-sequence x block, not the tile) and only adds step overhead.
    if T_out <= t_tile:
        tT = T_out                        # single tile (full dim is always legal)
    else:
        tT = max(16, (t_tile // 16) * 16)
    nT = pl.cdiv(T_out, tT)
    # Pad the halo up to a 16-row multiple so the per-tile window load is a
    # whole number of packed sublane groups.
    w_extra = 0 if halo == 0 else ((halo + 15) // 16) * 16
    xpad_rows = nT * tT + w_extra         # covers every tile's window (+ zero tail)

    # Tiny glue in plain JAX: im2col weight layout (K*C_in, C_out) + dtype casts.
    w_flat = (jnp.transpose(weight, (2, 1, 0))
              .reshape(K * C_in, C_out).astype(compute_dtype))
    if bias is None:
        bias = jnp.zeros((C_out,), jnp.float32)
    b2 = bias.reshape(1, C_out).astype(jnp.float32)

    kernel = functools.partial(_conv1d_kernel, padding=padding,
                               dilation=dilation, w_extra=w_extra)

    # Explicit VMEM budget (sized for the worst case: double-buffered blocks)
    # plus headroom for the compiler's im2col / f32-matmul temporaries.
    vmem_need = (2 * T * C_in * x_itemsize            # x block (double buffered)
                 + 2 * tT * C_out * x_itemsize        # out block (double buffered)
                 + xpad_rows * C_in * c_itemsize      # padded-sequence scratch
                 + 2 * K * C_in * C_out * c_itemsize  # weights
                 + 2 * C_out * 4                      # bias
                 + tT * K * C_in * c_itemsize         # im2col temporary
                 + tT * C_out * 4)                    # f32 matmul result temporary
    vmem_limit = int(min(max(int(vmem_need * 1.5) + (8 << 20), 32 << 20),
                         int(vmem_cap * 0.9)))

    cost = pl.CostEstimate(
        flops=2 * B * T_out * K * C_in * C_out,
        transcendentals=0,
        bytes_accessed=(B * T * C_in * x_itemsize
                        + B * T_out * C_out * x_itemsize
                        + K * C_in * C_out * c_itemsize
                        + C_out * 4))

    def _call(single_buffer_consts):
        # Weight / bias block indices never change -> single-buffer them to
        # halve their VMEM residency (zero overlap lost).
        const_kw = ({"pipeline_mode": pl.Buffered(1)}
                    if single_buffer_consts else {})
        grid_spec = pltpu.PrefetchScalarGridSpec(
            num_scalar_prefetch=0,
            grid=(B, nT),
            in_specs=[
                pl.BlockSpec((1, T, C_in), lambda bi, ti: (bi, 0, 0)),
                pl.BlockSpec((K * C_in, C_out), lambda bi, ti: (0, 0),
                             **const_kw),
                pl.BlockSpec((1, C_out), lambda bi, ti: (0, 0), **const_kw),
            ],
            out_specs=pl.BlockSpec((1, tT, C_out), lambda bi, ti: (bi, ti, 0)),
            scratch_shapes=[pltpu.VMEM((xpad_rows, C_in), compute_dtype)],
        )
        return pl.pallas_call(
            kernel,
            out_shape=jax.ShapeDtypeStruct((B, T_out, C_out), x.dtype),
            grid_spec=grid_spec,
            compiler_params=pltpu.CompilerParams(
                # The padded-sequence scratch is filled at ti == 0 and reused
                # by later time tiles of the same batch element, so the time
                # axis carries state and stays "arbitrary"; batch is parallel.
                dimension_semantics=("parallel", "arbitrary"),
                vmem_limit_bytes=vmem_limit,
            ),
            cost_estimate=cost,
        )(x, w_flat, b2)

    try:
        return _call(True)
    except Exception:
        # Fallback if this jax version rejects pipeline_mode=pl.Buffered(1).
        return _call(False)


if __name__ == "__main__":
    # Small FastSpeech2-like shapes: batch=2, seq=16, hidden=32, kernel_size=3,
    # padding=1 ("same" conv), stride=1, dilation=1.
    B, T, C_in, C_out, K = 2, 16, 32, 32, 3
    padding, dilation = 1, 1

    key = jax.random.PRNGKey(0)
    kx, kw, kb = jax.random.split(key, 3)

    x = jax.random.normal(kx, (B, T, C_in), dtype=jnp.float32)

    # Deterministic Xavier-uniform-like init (docstring intent of the module).
    fan_in, fan_out = C_in * K, C_out * K
    bound_w = (6.0 / (fan_in + fan_out)) ** 0.5
    weight = jax.random.uniform(kw, (C_out, C_in, K), jnp.float32,
                                minval=-bound_w, maxval=bound_w)
    bound_b = 1.0 / (fan_in ** 0.5)
    bias = jax.random.uniform(kb, (C_out,), jnp.float32,
                              minval=-bound_b, maxval=bound_b)

    out = conv_forward(x, weight, bias,
                       padding=padding, stride=1, dilation=dilation)
    out = jax.block_until_ready(out)

    # Pure-JAX reference mirroring the kernel numerics
    # (bf16 operands, f32 accumulation, f32 bias add).  For strict f32 parity
    # with PyTorch Conv1d, call conv_forward(..., compute_dtype=jnp.float32).
    cdtype = jnp.bfloat16
    xb = x.astype(cdtype).astype(jnp.float32)
    wb = jnp.transpose(weight, (2, 1, 0)).astype(cdtype).astype(jnp.float32)
    xp = jnp.pad(xb, ((0, 0), (padding, padding), (0, 0)))
    T_out = T + 2 * padding - dilation * (K - 1)
    ref = sum(jnp.einsum("btc,cd->btd",
                         xp[:, k * dilation:k * dilation + T_out, :], wb[k],
                         precision=jax.lax.Precision.HIGHEST)
              for k in range(K)) + bias[None, None, :]

    assert out.shape == (B, T_out, C_out), out.shape
    assert out.dtype == x.dtype
    err = jnp.max(jnp.abs(out - ref))
    assert err < 1e-3, f"max abs err {err}"

    print("KERNEL_OK")
</pallas_src>

<mosaic_0001>
module attributes {stable_mosaic.version = 11 : i64} {
  func.func @_conv1d_kernel(%arg0: i32, %arg1: i32, %arg2: memref<1x16x32xf32, #tpu.memory_space<vmem>>, %arg3: memref<96x32xbf16, #tpu.memory_space<vmem>>, %arg4: memref<1x32xf32, #tpu.memory_space<vmem>>, %arg5: memref<1x16x32xf32, #tpu.memory_space<vmem>>, %arg6: memref<32x32xbf16, #tpu.memory_space<vmem>>) attributes {dimension_semantics = [#tpu.dimension_semantics<parallel>, #tpu.dimension_semantics<arbitrary>], iteration_bounds = array<i64: 2, 1>, scalar_prefetch = 0 : i64, scratch_operands = 1 : i64, tpu.core_type = #tpu.core_type<tc>, window_params = [{transform_indices = @transform_0, window_bounds = array<i64: 1, 16, 32>}, {pipeline_mode = #tpu.pipeline_mode<synchronous>, transform_indices = @transform_1, window_bounds = array<i64: 96, 32>}, {pipeline_mode = #tpu.pipeline_mode<synchronous>, transform_indices = @transform_2, window_bounds = array<i64: 1, 32>}, {transform_indices = @transform_3, window_bounds = array<i64: 1, 16, 32>}]} {
    %c0_i32 = arith.constant 0 : i32
    %0 = arith.cmpi eq, %arg1, %c0_i32 : i32
    %1 = arith.extui %0 : i1 to i32
    %c0_i32_0 = arith.constant 0 : i32
    %2 = arith.cmpi ne, %1, %c0_i32_0 : i32
    scf.if %2 {
      %cst_8 = arith.constant 0.000000e+00 : bf16
      %19 = vector.broadcast %cst_8 : bf16 to vector<1x32xbf16>
      %c0_9 = arith.constant 0 : index
      %c0_10 = arith.constant 0 : index
      %20 = vector.load %arg6[%c0_9, %c0_10] : memref<32x32xbf16, #tpu.memory_space<vmem>>, vector<1x32xbf16>
      tpu.vector_store %arg6[%c0_9, %c0_10], %19 {strides = array<i32>} : memref<32x32xbf16, #tpu.memory_space<vmem>>, vector<1x32xbf16>,
      %cst_11 = arith.constant 0.000000e+00 : bf16
      %21 = vector.broadcast %cst_11 : bf16 to vector<15x32xbf16>
      %c17 = arith.constant 17 : index
      %c0_12 = arith.constant 0 : index
      %22 = vector.load %arg6[%c17, %c0_12] : memref<32x32xbf16, #tpu.memory_space<vmem>>, vector<15x32xbf16>
      tpu.vector_store %arg6[%c17, %c0_12], %21 {strides = array<i32>} : memref<32x32xbf16, #tpu.memory_space<vmem>>, vector<15x32xbf16>,
      %c0_13 = arith.constant 0 : index
      %c0_14 = arith.constant 0 : index
      %c0_15 = arith.constant 0 : index
      %23 = vector.load %arg2[%c0_13, %c0_14, %c0_15] : memref<1x16x32xf32, #tpu.memory_space<vmem>>, vector<1x16x32xf32>
      %24 = vector.shape_cast %23 : vector<1x16x32xf32> to vector<16x32xf32>
      %25 = arith.truncf %24 : vector<16x32xf32> to vector<16x32xbf16>
      %c1 = arith.constant 1 : index
      %c0_16 = arith.constant 0 : index
      %26 = vector.load %arg6[%c1, %c0_16] : memref<32x32xbf16, #tpu.memory_space<vmem>>, vector<16x32xbf16>
      tpu.vector_store %arg6[%c1, %c0_16], %25 {strides = array<i32>} : memref<32x32xbf16, #tpu.memory_space<vmem>>, vector<16x32xbf16>,
    } else {
    }
    %c16_i32 = arith.constant 16 : i32
    %3 = arith.muli %arg1, %c16_i32 : i32
    %4 = tpu.assume_multiple %3, 16 : i32
    %5 = arith.index_cast %4 : i32 to index
    %c0 = arith.constant 0 : index
    %6 = vector.load %arg6[%5, %c0] : memref<32x32xbf16, #tpu.memory_space<vmem>>, vector<32x32xbf16>
    %7 = vector.extract_strided_slice %6 {offsets = [0, 0], sizes = [16, 32], strides = [1, 1]} : vector<32x32xbf16> to vector<16x32xbf16>
    %8 = vector.extract_strided_slice %6 {offsets = [1, 0], sizes = [16, 32], strides = [1, 1]} : vector<32x32xbf16> to vector<16x32xbf16>
    %9 = vector.extract_strided_slice %6 {offsets = [2, 0], sizes = [16, 32], strides = [1, 1]} : vector<32x32xbf16> to vector<16x32xbf16>
    %10 = tpu.concatenate %7, %8, %9 in 1 : vector<16x32xbf16>, vector<16x32xbf16>, vector<16x32xbf16> -> vector<16x96xbf16>
    %c0_1 = arith.constant 0 : index
    %c0_2 = arith.constant 0 : index
    %11 = vector.load %arg3[%c0_1, %c0_2] : memref<96x32xbf16, #tpu.memory_space<vmem>>, vector<96x32xbf16>
    %cst = arith.constant dense<0.000000e+00> : vector<16x32xf32>
    %12 = tpu.matmul %10, %11, %cst {dimension_numbers = #tpu.dot_dimension_numbers<[1], [0], [0], [1], [0, 0, 1, 1], [], []>} : vector<16x96xbf16>, vector<96x32xbf16>, vector<16x32xf32> -> vector<16x32xf32>
    %c0_3 = arith.constant 0 : index
    %c0_4 = arith.constant 0 : index
    %13 = vector.load %arg4[%c0_3, %c0_4] : memref<1x32xf32, #tpu.memory_space<vmem>>, vector<1x32xf32>
    %14 = vector.broadcast %13 : vector<1x32xf32> to vector<16x32xf32>
    %15 = arith.addf %12, %14 : vector<16x32xf32>
    %c0_5 = arith.constant 0 : index
    %c0_6 = arith.constant 0 : index
    %c0_7 = arith.constant 0 : index
    %16 = vector.load %arg5[%c0_5, %c0_6, %c0_7] : memref<1x16x32xf32, #tpu.memory_space<vmem>>, vector<1x16x32xf32>
    %17 = vector.shape_cast %16 : vector<1x16x32xf32> to vector<16x32xf32>
    %18 = vector.shape_cast %15 : vector<16x32xf32> to vector<1x16x32xf32>
    tpu.vector_store %arg5[%c0_5, %c0_6, %c0_7], %18 {strides = array<i32>} : memref<1x16x32xf32, #tpu.memory_space<vmem>>, vector<1x16x32xf32>,
    return
  }
  func.func @transform_0(%arg0: i32, %arg1: i32) -> (i32, i32, i32) {
    %c0_i32 = arith.constant 0 : i32
    %c0_i32_0 = arith.constant 0 : i32
    %c0_i32_1 = arith.constant 0 : i32
    return %arg0, %c0_i32, %c0_i32_0 : i32, i32, i32
  }
  func.func @transform_1(%arg0: i32, %arg1: i32) -> (i32, i32) {
    %c0_i32 = arith.constant 0 : i32
    %c0_i32_0 = arith.constant 0 : i32
    %c0_i32_1 = arith.constant 0 : i32
    return %c0_i32, %c0_i32_0 : i32, i32
  }
  func.func @transform_2(%arg0: i32, %arg1: i32) -> (i32, i32) {
    %c0_i32 = arith.constant 0 : i32
    %c0_i32_0 = arith.constant 0 : i32
    %c0_i32_1 = arith.constant 0 : i32
    return %c0_i32, %c0_i32_0 : i32, i32
  }
  func.func @transform_3(%arg0: i32, %arg1: i32) -> (i32, i32, i32) {
    %c0_i32 = arith.constant 0 : i32
    %c0_i32_0 = arith.constant 0 : i32
    return %arg0, %arg1, %c0_i32 : i32, i32, i32
  }
}

module attributes {stable_mosaic.version = 11 : i64} {
  func.func @_conv1d_kernel(%arg0: i32, %arg1: i32, %arg2: memref<1x16x32xf32, #tpu.memory_space<vmem>>, %arg3: memref<96x32xbf16, #tpu.memory_space<vmem>>, %arg4: memref<1x32xf32, #tpu.memory_space<vmem>>, %arg5: memref<1x16x32xf32, #tpu.memory_space<vmem>>, %arg6: memref<32x32xbf16, #tpu.memory_space<vmem>>) attributes {dimension_semantics = [#tpu.dimension_semantics<parallel>, #tpu.dimension_semantics<arbitrary>], iteration_bounds = array<i64: 2, 1>, scalar_prefetch = 0 : i64, scratch_operands = 1 : i64, tpu.core_type = #tpu.core_type<tc>, window_params = [{transform_indices = @transform_0, window_bounds = array<i64: 1, 16, 32>}, {pipeline_mode = #tpu.pipeline_mode<synchronous>, transform_indices = @transform_1, window_bounds = array<i64: 96, 32>}, {pipeline_mode = #tpu.pipeline_mode<synchronous>, transform_indices = @transform_2, window_bounds = array<i64: 1, 32>}, {transform_indices = @transform_3, window_bounds = array<i64: 1, 16, 32>}]} {
    %c0_i32 = arith.constant 0 : i32
    %0 = arith.cmpi eq, %arg1, %c0_i32 : i32
    %1 = arith.extui %0 : i1 to i32
    %c0_i32_0 = arith.constant 0 : i32
    %2 = arith.cmpi ne, %1, %c0_i32_0 : i32
    scf.if %2 {
      %cst_8 = arith.constant 0.000000e+00 : bf16
      %19 = vector.broadcast %cst_8 : bf16 to vector<1x32xbf16>
      %c0_9 = arith.constant 0 : index
      %c0_10 = arith.constant 0 : index
      %20 = vector.load %arg6[%c0_9, %c0_10] : memref<32x32xbf16, #tpu.memory_space<vmem>>, vector<1x32xbf16>
      tpu.vector_store %arg6[%c0_9, %c0_10], %19 {strides = array<i32>} : memref<32x32xbf16, #tpu.memory_space<vmem>>, vector<1x32xbf16>,
      %cst_11 = arith.constant 0.000000e+00 : bf16
      %21 = vector.broadcast %cst_11 : bf16 to vector<15x32xbf16>
      %c17 = arith.constant 17 : index
      %c0_12 = arith.constant 0 : index
      %22 = vector.load %arg6[%c17, %c0_12] : memref<32x32xbf16, #tpu.memory_space<vmem>>, vector<15x32xbf16>
      tpu.vector_store %arg6[%c17, %c0_12], %21 {strides = array<i32>} : memref<32x32xbf16, #tpu.memory_space<vmem>>, vector<15x32xbf16>,
      %c0_13 = arith.constant 0 : index
      %c0_14 = arith.constant 0 : index
      %c0_15 = arith.constant 0 : index
      %23 = vector.load %arg2[%c0_13, %c0_14, %c0_15] : memref<1x16x32xf32, #tpu.memory_space<vmem>>, vector<1x16x32xf32>
      %24 = vector.shape_cast %23 : vector<1x16x32xf32> to vector<16x32xf32>
      %25 = arith.truncf %24 : vector<16x32xf32> to vector<16x32xbf16>
      %c1 = arith.constant 1 : index
      %c0_16 = arith.constant 0 : index
      %26 = vector.load %arg6[%c1, %c0_16] : memref<32x32xbf16, #tpu.memory_space<vmem>>, vector<16x32xbf16>
      tpu.vector_store %arg6[%c1, %c0_16], %25 {strides = array<i32>} : memref<32x32xbf16, #tpu.memory_space<vmem>>, vector<16x32xbf16>,
    } else {
    }
    %c16_i32 = arith.constant 16 : i32
    %3 = arith.muli %arg1, %c16_i32 : i32
    %4 = tpu.assume_multiple %3, 16 : i32
    %5 = arith.index_cast %4 : i32 to index
    %c0 = arith.constant 0 : index
    %6 = vector.load %arg6[%5, %c0] : memref<32x32xbf16, #tpu.memory_space<vmem>>, vector<32x32xbf16>
    %7 = vector.extract_strided_slice %6 {offsets = [0, 0], sizes = [16, 32], strides = [1, 1]} : vector<32x32xbf16> to vector<16x32xbf16>
    %8 = vector.extract_strided_slice %6 {offsets = [1, 0], sizes = [16, 32], strides = [1, 1]} : vector<32x32xbf16> to vector<16x32xbf16>
    %9 = vector.extract_strided_slice %6 {offsets = [2, 0], sizes = [16, 32], strides = [1, 1]} : vector<32x32xbf16> to vector<16x32xbf16>
    %10 = tpu.concatenate %7, %8, %9 in 1 : vector<16x32xbf16>, vector<16x32xbf16>, vector<16x32xbf16> -> vector<16x96xbf16>
    %c0_1 = arith.constant 0 : index
    %c0_2 = arith.constant 0 : index
    %11 = vector.load %arg3[%c0_1, %c0_2] : memref<96x32xbf16, #tpu.memory_space<vmem>>, vector<96x32xbf16>
    %cst = arith.constant dense<0.000000e+00> : vector<16x32xf32>
    %12 = tpu.matmul %10, %11, %cst {dimension_numbers = #tpu.dot_dimension_numbers<[1], [0], [0], [1], [0, 0, 1, 1], [], []>} : vector<16x96xbf16>, vector<96x32xbf16>, vector<16x32xf32> -> vector<16x32xf32>
    %c0_3 = arith.constant 0 : index
    %c0_4 = arith.constant 0 : index
    %13 = vector.load %arg4[%c0_3, %c0_4] : memref<1x32xf32, #tpu.memory_space<vmem>>, vector<1x32xf32>
    %14 = vector.broadcast %13 : vector<1x32xf32> to vector<16x32xf32>
    %15 = arith.addf %12, %14 : vector<16x32xf32>
    %c0_5 = arith.constant 0 : index
    %c0_6 = arith.constant 0 : index
    %c0_7 = arith.constant 0 : index
    %16 = vector.load %arg5[%c0_5, %c0_6, %c0_7] : memref<1x16x32xf32, #tpu.memory_space<vmem>>, vector<1x16x32xf32>
    %17 = vector.shape_cast %16 : vector<1x16x32xf32> to vector<16x32xf32>
    %18 = vector.shape_cast %15 : vector<16x32xf32> to vector<1x16x32xf32>
    tpu.vector_store %arg5[%c0_5, %c0_6, %c0_7], %18 {strides = array<i32>} : memref<1x16x32xf32, #tpu.memory_space<vmem>>, vector<1x16x32xf32>,
    return
  }
  func.func @transform_0(%arg0: i32, %arg1: i32) -> (i32, i32, i32) {
    %c0_i32 = arith.constant 0 : i32
    %c0_i32_0 = arith.constant 0 : i32
    %c0_i32_1 = arith.constant 0 : i32
    return %arg0, %c0_i32, %c0_i32_0 : i32, i32, i32
  }
  func.func @transform_1(%arg0: i32, %arg1: i32) -> (i32, i32) {
    %c0_i32 = arith.constant 0 : i32
    %c0_i32_0 = arith.constant 0 : i32
    %c0_i32_1 = arith.constant 0 : i32
    return %c0_i32, %c0_i32_0 : i32, i32
  }
  func.func @transform_2(%arg0: i32, %arg1: i32) -> (i32, i32) {
    %c0_i32 = arith.constant 0 : i32
    %c0_i32_0 = arith.constant 0 : i32
    %c0_i32_1 = arith.constant 0 : i32
    return %c0_i32, %c0_i32_0 : i32, i32
  }
  func.func @transform_3(%arg0: i32, %arg1: i32) -> (i32, i32, i32) {
    %c0_i32 = arith.constant 0 : i32
    %c0_i32_0 = arith.constant 0 : i32
    return %arg0, %arg1, %c0_i32 : i32, i32, i32
  }
}

</mosaic_0001>

<llo_original>
// kernel: tpu_custom_call.1
$region0: #{tpu_custom_call.1}
  #allocation0 [shape = 'u32[]', space=smem, size = 0x4, offset = 0x4, fixed_abs, tag = 'smem constant byte address 0x4 - core index']
  #allocation1 [shape = 'u32[144,128]{1,0:T(1,128)}', space=vmem, size = 0x12000, scoped, tag = 'internal scratch']
  #allocation2 [shape = 'bf16[32,32]{1,0:T(16,128)(2,1)}', space=vmem, size = 0x2000, scoped, tag = 'scratch operand']
  %s0 = inlined_call_operand.vmem [shape: f32[2,16,32], index: 0, kind: input, shape index: {}]
  %s1 = inlined_call_operand.vmem [shape: bf16[96,32], index: 1, kind: input, shape index: {}]
  %s2 = inlined_call_operand.vmem [shape: f32[1,32], index: 2, kind: input, shape index: {}]
  %s3 = inlined_call_operand.hbm [shape: f32[2,16,32], index: 3, kind: output, shape index: {}]
  %s4 = sld [smem:[#allocation0]]
  $region49: #{tpu_custom_call.1} parent=0
    _
  %s6 = ssub.s32 1, %s4
  %s7 = scalar_select 0, %s6, %s4
  $region1: #{tpu_custom_call.1} parent=0
    #allocation3 [shape = 'u8[16384]{0}', space=vmem, size = 0x4000, scoped, tag = 'output window, operand 0']
    #allocation4 [shape = 's32[2]{0}', space=sflag, size = 0x8, scoped, tag = 'scoped memory for tpu_custom_call.1']
    %8 = vsyncpa [#allocation4], 0
    %s9 = scalar_lea.sflag [#allocation4], 1
    %10 = vsyncpa %s9, 0
    loop: start=0, step=1, limit=4
    $region2: #{tpu_custom_call.1} parent=1 // loop_pre_header
      _
    $region3: #{tpu_custom_call.1} parent=1 // loop_header
      %s12 = sphi 0, %s16
      %p13 = scmp.ge.s32.totalorder %s12, 4
      %s19 = sphi 0, %s31
      %s20 = sphi 0, %s27
      %s21 = sphi 0, %s19
      %s22 = sphi 0, %s20
      %s23 = sphi 0, %s21
      %s24 = sphi 0, %s22
      %s34 = sphi 0, %s36
      %s37 = sphi 0, %s34
      %s38 = sphi 0, %s37
      %s54 = sphi 0, %s38
      %s58 = sphi 0, %s58
      %s60 = sphi 0, %s58
      %s61 = sphi 0, %s60
      %s75 = sphi 0, %s61
      %s79 = sphi 0, %s79
      %s81 = sphi 0, %s79
      %s82 = sphi 0, %s81
      %s96 = sphi 0, %s82
      %s104 = sphi 0, %s106
      %s107 = sphi 0, %s104
      %s108 = sphi 0, %s107
      %s124 = sphi 0, %s108
    $region4: #{tpu_custom_call.1} parent=1 // loop_header_branch
      %15 = sbr.rel (%p13) target = $region8
    $region5: #{tpu_custom_call.1} parent=1 // loop_body
      %s17 = ssub.s32 %s12, 1
      %s18 = ssub.s32 %s12, 2
      %s25 = sadd.s32 1, %s20
      %p26 = scmp.ge.s32.totalorder %s25, 1
      %s27 = scalar_select %p26, 0, %s25
      %s28 = sadd.s32 1, %s19
      %s29 = scalar_select %p26, %s28, %s19
      %p30 = scmp.ge.s32.totalorder %s29, 2
      %s31 = scalar_select %p30, 0, %s29
      %s32 = ssub.s32 %s19, %s31
      %p33 = scmp.eq.s32.totalorder %s32, 0
      %s35 = sadd.s32 %s34, 1
      %s36 = scalar_select %p33, %s34, %s35
      %p39 = pneg %p33
      %p40 = scmp.eq.s32.totalorder %s12, 1
      %p41 = por %p39, %p40
      %p42 = scmp.ne.s32.totalorder %s34, %s37
      %p43 = scmp.eq.s32.totalorder %s12, 0
      %p44 = por %p42, %p43
      %p45 = scmp.ne.s32.totalorder %s34, %s37
      %p46 = scmp.eq.s32.totalorder %s17, 1
      %p47 = por %p45, %p46
      %p48 = scmp.ne.s32.totalorder %s37, %s38
      %p49 = scmp.eq.s32.totalorder %s17, 0
      %p50 = por %p48, %p49
      %p51 = scmp.ne.s32.totalorder %s37, %s38
      %p52 = scmp.eq.s32.totalorder %s18, 1
      %p53 = por %p51, %p52
      %p55 = scmp.ne.s32.totalorder %s38, %s54
      %p56 = scmp.eq.s32.totalorder %s18, 0
      %p57 = por %p55, %p56
      %s59 = sadd.s32 %s58, 1
      %p62 = scmp.eq.s32.totalorder %s12, 1
      %p63 = scmp.ne.s32.totalorder %s58, %s60
      %p64 = scmp.eq.s32.totalorder %s12, 0
      %p65 = por %p63, %p64
      %p66 = scmp.ne.s32.totalorder %s58, %s60
      %p67 = scmp.eq.s32.totalorder %s17, 1
      %p68 = por %p66, %p67
      %p69 = scmp.ne.s32.totalorder %s60, %s61
      %p70 = scmp.eq.s32.totalorder %s17, 0
      %p71 = por %p69, %p70
      %p72 = scmp.ne.s32.totalorder %s60, %s61
      %p73 = scmp.eq.s32.totalorder %s18, 1
      %p74 = por %p72, %p73
      %p76 = scmp.ne.s32.totalorder %s61, %s75
      %p77 = scmp.eq.s32.totalorder %s18, 0
      %p78 = por %p76, %p77
      %s80 = sadd.s32 %s79, 1
      %p83 = scmp.eq.s32.totalorder %s12, 1
      %p84 = scmp.ne.s32.totalorder %s79, %s81
      %p85 = scmp.eq.s32.totalorder %s12, 0
      %p86 = por %p84, %p85
      %p87 = scmp.ne.s32.totalorder %s79, %s81
      %p88 = scmp.eq.s32.totalorder %s17, 1
      %p89 = por %p87, %p88
      %p90 = scmp.ne.s32.totalorder %s81, %s82
      %p91 = scmp.eq.s32.totalorder %s17, 0
      %p92 = por %p90, %p91
      %p93 = scmp.ne.s32.totalorder %s81, %s82
      %p94 = scmp.eq.s32.totalorder %s18, 1
      %p95 = por %p93, %p94
      %p97 = scmp.ne.s32.totalorder %s82, %s96
      %p98 = scmp.eq.s32.totalorder %s18, 0
      %p99 = por %p97, %p98
      %s100 = ssub.s32 %s19, %s31
      %s101 = ssub.s32 %s20, %s27
      %s102 = sor.u32 %s100, %s101
      %p103 = scmp.eq.s32.totalorder %s102, 0
      %s105 = sadd.s32 %s104, 1
      %s106 = scalar_select %p103, %s104, %s105
      %p109 = pneg %p103
      %p110 = scmp.eq.s32.totalorder %s12, 1
      %p111 = por %p109, %p110
      %p112 = scmp.ne.s32.totalorder %s104, %s107
      %p113 = scmp.eq.s32.totalorder %s12, 0
      %p114 = por %p112, %p113
      %p115 = scmp.ne.s32.totalorder %s104, %s107
      %p116 = scmp.eq.s32.totalorder %s17, 1
      %p117 = por %p115, %p116
      %p118 = scmp.ne.s32.totalorder %s107, %s108
      %p119 = scmp.eq.s32.totalorder %s17, 0
      %p120 = por %p118, %p119
      %p121 = scmp.ne.s32.totalorder %s107, %s108
      %p122 = scmp.eq.s32.totalorder %s18, 1
      %p123 = por %p121, %p122
      %p125 = scmp.ne.s32.totalorder %s108, %s124
      %p126 = scmp.eq.s32.totalorder %s18, 0
      %p127 = por %p125, %p126
      %p128 = scmp.le.s32.totalorder 1, %s12
      %p129 = scmp.lt.s32.totalorder %s12, 3
      %p130 = pnand %p128, %p129
      %p131 = pneg %p130
      // Predicated region
      $region9: #{tpu_custom_call.1} parent=5 // pred_check
        _
      $region10: #{tpu_custom_call.1} parent=5 // pred_check_branch
        %133 = sbr.rel (%p130) target = $region12
      $region11: #{tpu_custom_call.1} parent=5 // pred_region
        %s134 = ssub.s32 %s12, 1
        // Predicated region
        $region13: #{tpu_custom_call.1} parent=11 // pred_check
          %p135 = pneg %p71
        $region14: #{tpu_custom_call.1} parent=11 // pred_check_branch
          %137 = sbr.rel (%p135) target = $region16
        $region15: #{tpu_custom_call.1} parent=11 // pred_region
          _
        $region16: #{tpu_custom_call.1} parent=11 // pred_fallthru
          _
        // Predicated region
        $region17: #{tpu_custom_call.1} parent=11 // pred_check
          %p138 = pneg %p92
        $region18: #{tpu_custom_call.1} parent=11 // pred_check_branch
          %140 = sbr.rel (%p138) target = $region20
        $region19: #{tpu_custom_call.1} parent=11 // pred_region
          _
        $region20: #{tpu_custom_call.1} parent=11 // pred_fallthru
          _
      $region12: #{tpu_custom_call.1} parent=5 // pred_fallthru
        _
      %p141 = scmp.lt.s32.totalorder %s12, 2
      // Predicated region
      $region21: #{tpu_custom_call.1} parent=5 // pred_check
        %p142 = pneg %p141
      $region22: #{tpu_custom_call.1} parent=5 // pred_check_branch
        %144 = sbr.rel (%p142) target = $region24
      $region23: #{tpu_custom_call.1} parent=5 // pred_region
        // Predicated region
        $region25: #{tpu_custom_call.1} parent=23 // pred_check
          %p145 = pneg %p44
        $region26: #{tpu_custom_call.1} parent=23 // pred_check_branch
          %147 = sbr.rel (%p145) target = $region28
        $region27: #{tpu_custom_call.1} parent=23 // pred_region
          %p148 = scmp.lt.s32.totalorder %s19, 1
          %s149 = scalar_select %p148, %s19, 1
          %s150 = smul.addr %s149, 2
          %s151 = smul.addr %s150, 8
          %s152 = scalar_lea.vmem %s0, %s151
        $region28: #{tpu_custom_call.1} parent=23 // pred_fallthru
          _
      $region24: #{tpu_custom_call.1} parent=5 // pred_fallthru
        _
      %p153 = scmp.le.s32.totalorder 1, %s12
      %p154 = scmp.lt.s32.totalorder %s12, 3
      %p155 = pnand %p153, %p154
      %p156 = pneg %p155
      // Predicated region
      $region29: #{tpu_custom_call.1} parent=5 // pred_check
        _
      $region30: #{tpu_custom_call.1} parent=5 // pred_check_branch
        %158 = sbr.rel (%p155) target = $region32
      $region31: #{tpu_custom_call.1} parent=5 // pred_region
        %s159 = ssub.s32 %s12, 1
        %p160 = scmp.lt.s32.totalorder %s21, 1
        %s161 = scalar_select %p160, %s21, 1
        %s162 = smul.addr %s161, 2
        %s163 = smul.addr %s162, 8
        %s164 = scalar_lea.vmem %s0, %s163
        %p165 = pneg %p50
        %p166 = pneg %p47
        %p167 = pneg %p71
        %p168 = pneg %p68
        %p169 = pneg %p92
        %p170 = pneg %p89
        %p171 = pneg %p120
        %p172 = pneg %p117
        %s173 = sand.u32 %s107, 1
        %s174 = scalar_lea.sflag [#allocation4], %s173
        %s175 = sand.u32 %s107, 1
        %s176 = smul.addr %s175, 16
        %s177 = scalar_lea.vmem [#allocation3], %s176
        %p178 = scmp.lt.s32.totalorder %s21, 1
        %s179 = scalar_select %p178, %s21, 1
        %s180 = smul.addr %s179, 2
        %s181 = smul.addr %s180, 8
        %s182 = scalar_lea.vmem %s0, %s181
        %s183 = smul.u32 2, %s22
        %p185 = scmp.eq.s32.totalorder %s22, 0
        // Predicated region
        $region33: #{tpu_custom_call.1} parent=31 // pred_check
          %p186 = pneg %p185
        $region34: #{tpu_custom_call.1} parent=31 // pred_check_branch
          %188 = sbr.rel (%p186) target = $region36
        $region35: #{tpu_custom_call.1} parent=31 // pred_region
          %vm189 = vcmask 253952
          %vm190 = vsmask.f32 256
          %vm191 = vmand %vm189, %vm190
          %v192 = vld [vmem:[#allocation2] sm:$0x1]
          %v193 = vsel %vm191, 0, %v192
          %194 = vst [vmem:[#allocation2] sm:$0x1] %v193
          %vm195 = vcmask 261120
          %vm196 = vsmask.f32 7938
          %vm197 = vmand %vm195, %vm196
          %v198 = vld [vmem:[#allocation2 + $0x8] sm:$0xff]
          %v199 = vsel %vm197, 0, %v198
          %200 = vst [vmem:[#allocation2 + $0x8] sm:$0xff] %v199
          %v201 = vld [vmem:[%s182] sm:$0xff]
          %v202 = vld [vmem:[%s182 + $0x8] sm:$0xff]
          %v203 = vpack.c.bf16 %v202, %v201
          %v205 = vshrl.u32 %v203, 16
          %v207 = vrot.slane %v205, 7
          %v208 = vshll.u32 %v203, 16
          %v210 = vor.u32 %v207, %v208
          %v213 = vld [vmem:[#allocation2] sm:$0xff]
          %v214 = vsel %vm197, %v210, %v213
          %215 = vst [vmem:[#allocation2] sm:$0xff] %v214
          %v216 = vld [vmem:[#allocation2 + $0x8] sm:$0x1]
          %v217 = vsel %vm191, %v207, %v216
          %218 = vst [vmem:[#allocation2 + $0x8] sm:$0x1] %v217
        $region36: #{tpu_custom_call.1} parent=31 // pred_fallthru
          _
        %s219 = smul.u32 %s22, 16
        %s220 = sshra.s32 %s219, 4
        %s221 = sand.u32 %s219, 15
        %s222 = smul.addr %s220, 8
        %s223 = scalar_lea.vmem [#allocation2], %s222
        %v224 = vld [vmem:[%s223] sm:$0xff]
        %v225 = vld [vmem:[%s223 + $0x8] sm:$0xff]
        %vm226 = vsmask.f32 7424
        %v228 = vshrl.u32 %v224, 16
        %v230 = vshll.u32 %v224, 16
        %v232 = vrot.slane %v230, 1
        %v233 = vor.u32 %v228, %v232
        %v235 = vshll.u32 %v225, 16
        %v237 = vrot.slane %v235, 1
        %v238 = vsel %vm226, %v233, %v237
        %239 = vrot.lane.b32.xlu0 %v238, 32
        %v240 = vpop.permute.xlu0 %239
        %vm243 = vcmask 1046528
        %v244 = vrot.slane %v224, 1
        %v245 = vrot.slane %v225, 1
        %v246 = vsel %vm243, %v244, %v245
        %247 = vrot.lane.b32.xlu0 %v246, 64
        %v248 = vpop.permute.xlu0 %247
        %vm249 = vcmask 261120
        %v251 = vsel %vm249, %v224, %v240
        %vm252 = vcmask 523264
        %v254 = vsel %vm252, %v251, %v248
        %v255 = vld [vmem:[%s1] sm:$0xf]
        %v256 = vld [vmem:[%s1 + $0x4] sm:$0xf]
        %v257 = vld [vmem:[%s1 + $0x8] sm:$0xf]
        %v258 = vld [vmem:[%s1 + $0xc] sm:$0xf]
        %v259 = vld [vmem:[%s1 + $0x10] sm:$0xf]
        %v260 = vld [vmem:[%s1 + $0x14] sm:$0xf]
        %v261 = vld [vmem:[%s1 + $0x18] sm:$0xf]
        %v262 = vld [vmem:[%s1 + $0x1c] sm:$0xf]
        %v263 = vld [vmem:[%s1 + $0x20] sm:$0xf]
        %v264 = vld [vmem:[%s1 + $0x24] sm:$0xf]
        %v265 = vld [vmem:[%s1 + $0x28] sm:$0xf]
        %v266 = vld [vmem:[%s1 + $0x2c] sm:$0xf]
        %v267 = vld [vmem:[%s2] sm:$0x1]
        %v269 = vlaneseq
        %v270 = vshrl.u32 %v269, 7
        %v271 = vsub.s32 0, %v270
        %v272 = vrot.slane %v267, %v271
        %v286 = vunpack.c.l.b16 %v255
        %v287 = vunpack.c.l.b16 %v256
        %v288 = vunpack.c.l.b16 %v257
        %v289 = vunpack.c.l.b16 %v258
        %v290 = vunpack.c.l.b16 %v259
        %v291 = vunpack.c.l.b16 %v260
        %v292 = vunpack.c.l.b16 %v261
        %v293 = vunpack.c.l.b16 %v262
        %v294 = vunpack.c.l.b16 %v263
        %v295 = vunpack.c.l.b16 %v264
        %v296 = vunpack.c.l.b16 %v265
        %v297 = vunpack.c.l.b16 %v266
        %v298 = vpack.c.b16 %v287, %v286
        %v299 = vpack.c.b16 %v289, %v288
        %v300 = vpack.c.b16 %v291, %v290
        %v301 = vpack.c.b16 %v293, %v292
        %v302 = vpack.c.b16 %v295, %v294
        %v303 = vpack.c.b16 %v297, %v296
        %vm310 = vcmask 785408
        %v311 = vsel %vm310, %v254, 0
        %313 = vmatprep.subr.bf16.mxu0 0
        %314 = vmatpush1.bf16.msra.mxu0 %v298
        %315 = vmatprep.subr.bf16.mxu0 0
        %316 = vmatpush1.bf16.msra.mxu0 %v299
        %317 = vmatprep.subr.bf16.mxu0 0
        %318 = vmatpush1.bf16.msra.mxu0 %v300
        %319 = vmatprep.subr.bf16.mxu0 0
        %320 = vmatpush1.bf16.msra.mxu0 %v301
        %321 = vmatprep.subr.bf16.mxu0 0
        %322 = vmatpush1.bf16.msra.mxu0 %v302
        %323 = vmatprep.subr.bf16.mxu0 0
        %324 = vmatpush1.bf16.msra.mxu0 %v303
        %325 = vmatprep.subr.bf16.mxu0 0
        %326 = vmatpush1.bf16.msra.mxu0 0
        %327 = vmatprep.subr.bf16.mxu0 0
        %328 = vmatpush1.bf16.msra.mxu0 0
        %329 = vmatprep.subr.bf16.mxu0 0
        %330 = vmatpush1.bf16.msra.mxu0 0
        %331 = vmatprep.subr.bf16.mxu0 0
        %332 = vmatpush1.bf16.msra.mxu0 0
        %333 = vmatprep.subr.bf16.mxu0 0
        %334 = vmatpush1.bf16.msra.mxu0 0
        %335 = vmatprep.subr.bf16.mxu0 0
        %336 = vmatpush1.bf16.msra.mxu0 0
        %337 = vmatprep.subr.bf16.mxu0 0
        %338 = vmatpush1.bf16.msra.mxu0 0
        %339 = vmatprep.subr.bf16.mxu0 0
        %340 = vmatpush1.bf16.msra.mxu0 0
        %341 = vmatprep.subr.bf16.mxu0 0
        %342 = vmatpush1.bf16.msra.mxu0 0
        %343 = vmatprep.subr.bf16.mxu0 0
        %344 = vmatpush1.bf16.msra.mxu0 0
        %345 = vmatprep.mubr.bf16.mxu0 0
        %346 = vmatmul.mubr.bf16.gmra.mrb[0].mxu0 %v311
        %v347 = vpop.f32.mrb[0].mxu0
        %v348 = vadd.f32 %v272, %v347
        %v349 = vpop.f32.mrb[0].mxu0
        %v350 = vpop.f32.mrb[0].mxu0
        %v351 = vadd.f32 %v272, %v350
        %v352 = vpop.f32.mrb[0].mxu0
        %353 = vdwg.mxu0
        %354 = vst.msk [vmem:[%s177] sm:$0xff] %vm249, %v348
        %355 = vst.msk [vmem:[%s177 + $0x8] sm:$0xff] %vm249, %v351
        %s356 = sand.u32 %s107, 1
        %s357 = scalar_lea.sflag [#allocation4], %s356
        %s358 = sand.u32 %s107, 1
        %s359 = smul.addr %s358, 16
        %s360 = scalar_lea.vmem [#allocation3], %s359
        // Predicated region
        $region37: #{tpu_custom_call.1} parent=31 // pred_check
          %p361 = pneg %p117
        $region38: #{tpu_custom_call.1} parent=31 // pred_check_branch
          %363 = sbr.rel (%p361) target = $region40
        $region39: #{tpu_custom_call.1} parent=31 // pred_region
          %s364 = smul.u32 2, %s22
          %s366 = ssub.s32 256, 256
          %367 = vsyncadd %s357, %s366
          %s368 = smul.addr %s21, 2
          %s369 = sadd.s32 %s364, %s368
          %s370 = smul.addr %s369, 128
          %s371 = scalar_lea.hbm %s3, %s370
          %s372 = sshll.u32 %s360, 4
          %s373 = int_to_ptr.vmem [resolvable:$true] %s372
          %378 = dma.vmem_to_hbm [thread:$0]  %s373, 256, %s371, %s357, 128, 128, 8
        $region40: #{tpu_custom_call.1} parent=31 // pred_fallthru
          _
      $region32: #{tpu_custom_call.1} parent=5 // pred_fallthru
        _
      %p379 = scmp.le.s32.totalorder 2, %s12
      // Predicated region
      $region41: #{tpu_custom_call.1} parent=5 // pred_check
        %p380 = pneg %p379
      $region42: #{tpu_custom_call.1} parent=5 // pred_check_branch
        %382 = sbr.rel (%p380) target = $region44
      $region43: #{tpu_custom_call.1} parent=5 // pred_region
        %s383 = ssub.s32 %s12, 2
        // Predicated region
        $region45: #{tpu_custom_call.1} parent=43 // pred_check
          %p384 = pneg %p123
        $region46: #{tpu_custom_call.1} parent=43 // pred_check_branch
          %386 = sbr.rel (%p384) target = $region48
        $region47: #{tpu_custom_call.1} parent=43 // pred_region
          %s387 = sand.u32 %s108, 1
          %s388 = scalar_lea.sflag [#allocation4], %s387
          %s389 = sand.u32 %s108, 1
          %s390 = smul.addr %s389, 16
          %s391 = scalar_lea.vmem [#allocation3], %s390
          %392 = dma.done %s388, 256
        $region48: #{tpu_custom_call.1} parent=43 // pred_fallthru
          _
      $region44: #{tpu_custom_call.1} parent=5 // pred_fallthru
        _
    $region6: #{tpu_custom_call.1} parent=1 // loop_footer
      %s16 = sadd.s32 1, %s12
    $region7: #{tpu_custom_call.1} parent=1 // loop_footer_branch
      %11 = sbr.rel target = $region3
    $region8: #{tpu_custom_call.1} parent=1 // loop_exit
      _
    %393 = vsyncpa [#allocation4], 1
    %s394 = scalar_lea.sflag [#allocation4], 1
    %395 = vsyncpa %s394, 1

// kernel: tpu_custom_call.1
$region0: #{tpu_custom_call.1}
  #allocation0 [shape = 'u32[]', space=smem, size = 0x4, offset = 0x4, fixed_abs, tag = 'smem constant byte address 0x4 - core index']
  #allocation1 [shape = 'u32[144,128]{1,0:T(1,128)}', space=vmem, size = 0x12000, scoped, tag = 'internal scratch']
  #allocation2 [shape = 'bf16[32,32]{1,0:T(16,128)(2,1)}', space=vmem, size = 0x2000, scoped, tag = 'scratch operand']
  %s0 = inlined_call_operand.vmem [shape: f32[2,16,32], index: 0, kind: input, shape index: {}]
  %s1 = inlined_call_operand.vmem [shape: bf16[96,32], index: 1, kind: input, shape index: {}]
  %s2 = inlined_call_operand.vmem [shape: f32[1,32], index: 2, kind: input, shape index: {}]
  %s3 = inlined_call_operand.hbm [shape: f32[2,16,32], index: 3, kind: output, shape index: {}]
  %s4 = sld [smem:[#allocation0]]
  $region49: #{tpu_custom_call.1} parent=0
    _
  %s6 = ssub.s32 1, %s4
  %s7 = scalar_select 0, %s6, %s4
  $region1: #{tpu_custom_call.1} parent=0
    #allocation3 [shape = 'u8[16384]{0}', space=vmem, size = 0x4000, scoped, tag = 'output window, operand 0']
    #allocation4 [shape = 's32[2]{0}', space=sflag, size = 0x8, scoped, tag = 'scoped memory for tpu_custom_call.1']
    %8 = vsyncpa [#allocation4], 0
    %s9 = scalar_lea.sflag [#allocation4], 1
    %10 = vsyncpa %s9, 0
    loop: start=0, step=1, limit=4
    $region2: #{tpu_custom_call.1} parent=1 // loop_pre_header
      _
    $region3: #{tpu_custom_call.1} parent=1 // loop_header
      %s12 = sphi 0, %s16
      %p13 = scmp.ge.s32.totalorder %s12, 4
      %s19 = sphi 0, %s31
      %s20 = sphi 0, %s27
      %s21 = sphi 0, %s19
      %s22 = sphi 0, %s20
      %s23 = sphi 0, %s21
      %s24 = sphi 0, %s22
      %s34 = sphi 0, %s36
      %s37 = sphi 0, %s34
      %s38 = sphi 0, %s37
      %s54 = sphi 0, %s38
      %s58 = sphi 0, %s58
      %s60 = sphi 0, %s58
      %s61 = sphi 0, %s60
      %s75 = sphi 0, %s61
      %s79 = sphi 0, %s79
      %s81 = sphi 0, %s79
      %s82 = sphi 0, %s81
      %s96 = sphi 0, %s82
      %s104 = sphi 0, %s106
      %s107 = sphi 0, %s104
      %s108 = sphi 0, %s107
      %s124 = sphi 0, %s108
    $region4: #{tpu_custom_call.1} parent=1 // loop_header_branch
      %15 = sbr.rel (%p13) target = $region8
    $region5: #{tpu_custom_call.1} parent=1 // loop_body
      %s17 = ssub.s32 %s12, 1
      %s18 = ssub.s32 %s12, 2
      %s25 = sadd.s32 1, %s20
      %p26 = scmp.ge.s32.totalorder %s25, 1
      %s27 = scalar_select %p26, 0, %s25
      %s28 = sadd.s32 1, %s19
      %s29 = scalar_select %p26, %s28, %s19
      %p30 = scmp.ge.s32.totalorder %s29, 2
      %s31 = scalar_select %p30, 0, %s29
      %s32 = ssub.s32 %s19, %s31
      %p33 = scmp.eq.s32.totalorder %s32, 0
      %s35 = sadd.s32 %s34, 1
      %s36 = scalar_select %p33, %s34, %s35
      %p39 = pneg %p33
      %p40 = scmp.eq.s32.totalorder %s12, 1
      %p41 = por %p39, %p40
      %p42 = scmp.ne.s32.totalorder %s34, %s37
      %p43 = scmp.eq.s32.totalorder %s12, 0
      %p44 = por %p42, %p43
      %p45 = scmp.ne.s32.totalorder %s34, %s37
      %p46 = scmp.eq.s32.totalorder %s17, 1
      %p47 = por %p45, %p46
      %p48 = scmp.ne.s32.totalorder %s37, %s38
      %p49 = scmp.eq.s32.totalorder %s17, 0
      %p50 = por %p48, %p49
      %p51 = scmp.ne.s32.totalorder %s37, %s38
      %p52 = scmp.eq.s32.totalorder %s18, 1
      %p53 = por %p51, %p52
      %p55 = scmp.ne.s32.totalorder %s38, %s54
      %p56 = scmp.eq.s32.totalorder %s18, 0
      %p57 = por %p55, %p56
      %s59 = sadd.s32 %s58, 1
      %p62 = scmp.eq.s32.totalorder %s12, 1
      %p63 = scmp.ne.s32.totalorder %s58, %s60
      %p64 = scmp.eq.s32.totalorder %s12, 0
      %p65 = por %p63, %p64
      %p66 = scmp.ne.s32.totalorder %s58, %s60
      %p67 = scmp.eq.s32.totalorder %s17, 1
      %p68 = por %p66, %p67
      %p69 = scmp.ne.s32.totalorder %s60, %s61
      %p70 = scmp.eq.s32.totalorder %s17, 0
      %p71 = por %p69, %p70
      %p72 = scmp.ne.s32.totalorder %s60, %s61
      %p73 = scmp.eq.s32.totalorder %s18, 1
      %p74 = por %p72, %p73
      %p76 = scmp.ne.s32.totalorder %s61, %s75
      %p77 = scmp.eq.s32.totalorder %s18, 0
      %p78 = por %p76, %p77
      %s80 = sadd.s32 %s79, 1
      %p83 = scmp.eq.s32.totalorder %s12, 1
      %p84 = scmp.ne.s32.totalorder %s79, %s81
      %p85 = scmp.eq.s32.totalorder %s12, 0
      %p86 = por %p84, %p85
      %p87 = scmp.ne.s32.totalorder %s79, %s81
      %p88 = scmp.eq.s32.totalorder %s17, 1
      %p89 = por %p87, %p88
      %p90 = scmp.ne.s32.totalorder %s81, %s82
      %p91 = scmp.eq.s32.totalorder %s17, 0
      %p92 = por %p90, %p91
      %p93 = scmp.ne.s32.totalorder %s81, %s82
      %p94 = scmp.eq.s32.totalorder %s18, 1
      %p95 = por %p93, %p94
      %p97 = scmp.ne.s32.totalorder %s82, %s96
      %p98 = scmp.eq.s32.totalorder %s18, 0
      %p99 = por %p97, %p98
      %s100 = ssub.s32 %s19, %s31
      %s101 = ssub.s32 %s20, %s27
      %s102 = sor.u32 %s100, %s101
      %p103 = scmp.eq.s32.totalorder %s102, 0
      %s105 = sadd.s32 %s104, 1
      %s106 = scalar_select %p103, %s104, %s105
      %p109 = pneg %p103
      %p110 = scmp.eq.s32.totalorder %s12, 1
      %p111 = por %p109, %p110
      %p112 = scmp.ne.s32.totalorder %s104, %s107
      %p113 = scmp.eq.s32.totalorder %s12, 0
      %p114 = por %p112, %p113
      %p115 = scmp.ne.s32.totalorder %s104, %s107
      %p116 = scmp.eq.s32.totalorder %s17, 1
      %p117 = por %p115, %p116
      %p118 = scmp.ne.s32.totalorder %s107, %s108
      %p119 = scmp.eq.s32.totalorder %s17, 0
      %p120 = por %p118, %p119
      %p121 = scmp.ne.s32.totalorder %s107, %s108
      %p122 = scmp.eq.s32.totalorder %s18, 1
      %p123 = por %p121, %p122
      %p125 = scmp.ne.s32.totalorder %s108, %s124
      %p126 = scmp.eq.s32.totalorder %s18, 0
      %p127 = por %p125, %p126
      %p128 = scmp.le.s32.totalorder 1, %s12
      %p129 = scmp.lt.s32.totalorder %s12, 3
      %p130 = pnand %p128, %p129
      %p131 = pneg %p130
      // Predicated region
      $region9: #{tpu_custom_call.1} parent=5 // pred_check
        _
      $region10: #{tpu_custom_call.1} parent=5 // pred_check_branch
        %133 = sbr.rel (%p130) target = $region12
      $region11: #{tpu_custom_call.1} parent=5 // pred_region
        %s134 = ssub.s32 %s12, 1
        // Predicated region
        $region13: #{tpu_custom_call.1} parent=11 // pred_check
          %p135 = pneg %p71
        $region14: #{tpu_custom_call.1} parent=11 // pred_check_branch
          %137 = sbr.rel (%p135) target = $region16
        $region15: #{tpu_custom_call.1} parent=11 // pred_region
          _
        $region16: #{tpu_custom_call.1} parent=11 // pred_fallthru
          _
        // Predicated region
        $region17: #{tpu_custom_call.1} parent=11 // pred_check
          %p138 = pneg %p92
        $region18: #{tpu_custom_call.1} parent=11 // pred_check_branch
          %140 = sbr.rel (%p138) target = $region20
        $region19: #{tpu_custom_call.1} parent=11 // pred_region
          _
        $region20: #{tpu_custom_call.1} parent=11 // pred_fallthru
          _
      $region12: #{tpu_custom_call.1} parent=5 // pred_fallthru
        _
      %p141 = scmp.lt.s32.totalorder %s12, 2
      // Predicated region
      $region21: #{tpu_custom_call.1} parent=5 // pred_check
        %p142 = pneg %p141
      $region22: #{tpu_custom_call.1} parent=5 // pred_check_branch
        %144 = sbr.rel (%p142) target = $region24
      $region23: #{tpu_custom_call.1} parent=5 // pred_region
        // Predicated region
        $region25: #{tpu_custom_call.1} parent=23 // pred_check
          %p145 = pneg %p44
        $region26: #{tpu_custom_call.1} parent=23 // pred_check_branch
          %147 = sbr.rel (%p145) target = $region28
        $region27: #{tpu_custom_call.1} parent=23 // pred_region
          %p148 = scmp.lt.s32.totalorder %s19, 1
          %s149 = scalar_select %p148, %s19, 1
          %s150 = smul.addr %s149, 2
          %s151 = smul.addr %s150, 8
          %s152 = scalar_lea.vmem %s0, %s151
        $region28: #{tpu_custom_call.1} parent=23 // pred_fallthru
          _
      $region24: #{tpu_custom_call.1} parent=5 // pred_fallthru
        _
      %p153 = scmp.le.s32.totalorder 1, %s12
      %p154 = scmp.lt.s32.totalorder %s12, 3
      %p155 = pnand %p153, %p154
      %p156 = pneg %p155
      // Predicated region
      $region29: #{tpu_custom_call.1} parent=5 // pred_check
        _
      $region30: #{tpu_custom_call.1} parent=5 // pred_check_branch
        %158 = sbr.rel (%p155) target = $region32
      $region31: #{tpu_custom_call.1} parent=5 // pred_region
        %s159 = ssub.s32 %s12, 1
        %p160 = scmp.lt.s32.totalorder %s21, 1
        %s161 = scalar_select %p160, %s21, 1
        %s162 = smul.addr %s161, 2
        %s163 = smul.addr %s162, 8
        %s164 = scalar_lea.vmem %s0, %s163
        %p165 = pneg %p50
        %p166 = pneg %p47
        %p167 = pneg %p71
        %p168 = pneg %p68
        %p169 = pneg %p92
        %p170 = pneg %p89
        %p171 = pneg %p120
        %p172 = pneg %p117
        %s173 = sand.u32 %s107, 1
        %s174 = scalar_lea.sflag [#allocation4], %s173
        %s175 = sand.u32 %s107, 1
        %s176 = smul.addr %s175, 16
        %s177 = scalar_lea.vmem [#allocation3], %s176
        %p178 = scmp.lt.s32.totalorder %s21, 1
        %s179 = scalar_select %p178, %s21, 1
        %s180 = smul.addr %s179, 2
        %s181 = smul.addr %s180, 8
        %s182 = scalar_lea.vmem %s0, %s181
        %s183 = smul.u32 2, %s22
        %p185 = scmp.eq.s32.totalorder %s22, 0
        // Predicated region
        $region33: #{tpu_custom_call.1} parent=31 // pred_check
          %p186 = pneg %p185
        $region34: #{tpu_custom_call.1} parent=31 // pred_check_branch
          %188 = sbr.rel (%p186) target = $region36
        $region35: #{tpu_custom_call.1} parent=31 // pred_region
          %vm189 = vcmask 253952
          %vm190 = vsmask.f32 256
          %vm191 = vmand %vm189, %vm190
          %v192 = vld [vmem:[#allocation2] sm:$0x1]
          %v193 = vsel %vm191, 0, %v192
          %194 = vst [vmem:[#allocation2] sm:$0x1] %v193
          %vm195 = vcmask 261120
          %vm196 = vsmask.f32 7938
          %vm197 = vmand %vm195, %vm196
          %v198 = vld [vmem:[#allocation2 + $0x8] sm:$0xff]
          %v199 = vsel %vm197, 0, %v198
          %200 = vst [vmem:[#allocation2 + $0x8] sm:$0xff] %v199
          %v201 = vld [vmem:[%s182] sm:$0xff]
          %v202 = vld [vmem:[%s182 + $0x8] sm:$0xff]
          %v203 = vpack.c.bf16 %v202, %v201
          %v205 = vshrl.u32 %v203, 16
          %v207 = vrot.slane %v205, 7
          %v208 = vshll.u32 %v203, 16
          %v210 = vor.u32 %v207, %v208
          %v213 = vld [vmem:[#allocation2] sm:$0xff]
          %v214 = vsel %vm197, %v210, %v213
          %215 = vst [vmem:[#allocation2] sm:$0xff] %v214
          %v216 = vld [vmem:[#allocation2 + $0x8] sm:$0x1]
          %v217 = vsel %vm191, %v207, %v216
          %218 = vst [vmem:[#allocation2 + $0x8] sm:$0x1] %v217
        $region36: #{tpu_custom_call.1} parent=31 // pred_fallthru
          _
        %s219 = smul.u32 %s22, 16
        %s220 = sshra.s32 %s219, 4
        %s221 = sand.u32 %s219, 15
        %s222 = smul.addr %s220, 8
        %s223 = scalar_lea.vmem [#allocation2], %s222
        %v224 = vld [vmem:[%s223] sm:$0xff]
        %v225 = vld [vmem:[%s223 + $0x8] sm:$0xff]
        %vm226 = vsmask.f32 7424
        %v228 = vshrl.u32 %v224, 16
        %v230 = vshll.u32 %v224, 16
        %v232 = vrot.slane %v230, 1
        %v233 = vor.u32 %v228, %v232
        %v235 = vshll.u32 %v225, 16
        %v237 = vrot.slane %v235, 1
        %v238 = vsel %vm226, %v233, %v237
        %239 = vrot.lane.b32.xlu0 %v238, 32
        %v240 = vpop.permute.xlu0 %239
        %vm243 = vcmask 1046528
        %v244 = vrot.slane %v224, 1
        %v245 = vrot.slane %v225, 1
        %v246 = vsel %vm243, %v244, %v245
        %247 = vrot.lane.b32.xlu0 %v246, 64
        %v248 = vpop.permute.xlu0 %247
        %vm249 = vcmask 261120
        %v251 = vsel %vm249, %v224, %v240
        %vm252 = vcmask 523264
        %v254 = vsel %vm252, %v251, %v248
        %v255 = vld [vmem:[%s1] sm:$0xf]
        %v256 = vld [vmem:[%s1 + $0x4] sm:$0xf]
        %v257 = vld [vmem:[%s1 + $0x8] sm:$0xf]
        %v258 = vld [vmem:[%s1 + $0xc] sm:$0xf]
        %v259 = vld [vmem:[%s1 + $0x10] sm:$0xf]
        %v260 = vld [vmem:[%s1 + $0x14] sm:$0xf]
        %v261 = vld [vmem:[%s1 + $0x18] sm:$0xf]
        %v262 = vld [vmem:[%s1 + $0x1c] sm:$0xf]
        %v263 = vld [vmem:[%s1 + $0x20] sm:$0xf]
        %v264 = vld [vmem:[%s1 + $0x24] sm:$0xf]
        %v265 = vld [vmem:[%s1 + $0x28] sm:$0xf]
        %v266 = vld [vmem:[%s1 + $0x2c] sm:$0xf]
        %v267 = vld [vmem:[%s2] sm:$0x1]
        %v269 = vlaneseq
        %v270 = vshrl.u32 %v269, 7
        %v271 = vsub.s32 0, %v270
        %v272 = vrot.slane %v267, %v271
        %v286 = vunpack.c.l.b16 %v255
        %v287 = vunpack.c.l.b16 %v256
        %v288 = vunpack.c.l.b16 %v257
        %v289 = vunpack.c.l.b16 %v258
        %v290 = vunpack.c.l.b16 %v259
        %v291 = vunpack.c.l.b16 %v260
        %v292 = vunpack.c.l.b16 %v261
        %v293 = vunpack.c.l.b16 %v262
        %v294 = vunpack.c.l.b16 %v263
        %v295 = vunpack.c.l.b16 %v264
        %v296 = vunpack.c.l.b16 %v265
        %v297 = vunpack.c.l.b16 %v266
        %v298 = vpack.c.b16 %v287, %v286
        %v299 = vpack.c.b16 %v289, %v288
        %v300 = vpack.c.b16 %v291, %v290
        %v301 = vpack.c.b16 %v293, %v292
        %v302 = vpack.c.b16 %v295, %v294
        %v303 = vpack.c.b16 %v297, %v296
        %vm310 = vcmask 785408
        %v311 = vsel %vm310, %v254, 0
        %313 = vmatprep.subr.bf16.mxu0 0
        %314 = vmatpush1.bf16.msra.mxu0 %v298
        %315 = vmatprep.subr.bf16.mxu0 0
        %316 = vmatpush1.bf16.msra.mxu0 %v299
        %317 = vmatprep.subr.bf16.mxu0 0
        %318 = vmatpush1.bf16.msra.mxu0 %v300
        %319 = vmatprep.subr.bf16.mxu0 0
        %320 = vmatpush1.bf16.msra.mxu0 %v301
        %321 = vmatprep.subr.bf16.mxu0 0
        %322 = vmatpush1.bf16.msra.mxu0 %v302
        %323 = vmatprep.subr.bf16.mxu0 0
        %324 = vmatpush1.bf16.msra.mxu0 %v303
        %325 = vmatprep.subr.bf16.mxu0 0
        %326 = vmatpush1.bf16.msra.mxu0 0
        %327 = vmatprep.subr.bf16.mxu0 0
        %328 = vmatpush1.bf16.msra.mxu0 0
        %329 = vmatprep.subr.bf16.mxu0 0
        %330 = vmatpush1.bf16.msra.mxu0 0
        %331 = vmatprep.subr.bf16.mxu0 0
        %332 = vmatpush1.bf16.msra.mxu0 0
        %333 = vmatprep.subr.bf16.mxu0 0
        %334 = vmatpush1.bf16.msra.mxu0 0
        %335 = vmatprep.subr.bf16.mxu0 0
        %336 = vmatpush1.bf16.msra.mxu0 0
        %337 = vmatprep.subr.bf16.mxu0 0
        %338 = vmatpush1.bf16.msra.mxu0 0
        %339 = vmatprep.subr.bf16.mxu0 0
        %340 = vmatpush1.bf16.msra.mxu0 0
        %341 = vmatprep.subr.bf16.mxu0 0
        %342 = vmatpush1.bf16.msra.mxu0 0
        %343 = vmatprep.subr.bf16.mxu0 0
        %344 = vmatpush1.bf16.msra.mxu0 0
        %345 = vmatprep.mubr.bf16.mxu0 0
        %346 = vmatmul.mubr.bf16.gmra.mrb[0].mxu0 %v311
        %v347 = vpop.f32.mrb[0].mxu0
        %v348 = vadd.f32 %v272, %v347
        %v349 = vpop.f32.mrb[0].mxu0
        %v350 = vpop.f32.mrb[0].mxu0
        %v351 = vadd.f32 %v272, %v350
        %v352 = vpop.f32.mrb[0].mxu0
        %353 = vdwg.mxu0
        %354 = vst.msk [vmem:[%s177] sm:$0xff] %vm249, %v348
        %355 = vst.msk [vmem:[%s177 + $0x8] sm:$0xff] %vm249, %v351
        %s356 = sand.u32 %s107, 1
        %s357 = scalar_lea.sflag [#allocation4], %s356
        %s358 = sand.u32 %s107, 1
        %s359 = smul.addr %s358, 16
        %s360 = scalar_lea.vmem [#allocation3], %s359
        // Predicated region
        $region37: #{tpu_custom_call.1} parent=31 // pred_check
          %p361 = pneg %p117
        $region38: #{tpu_custom_call.1} parent=31 // pred_check_branch
          %363 = sbr.rel (%p361) target = $region40
        $region39: #{tpu_custom_call.1} parent=31 // pred_region
          %s364 = smul.u32 2, %s22
          %s366 = ssub.s32 256, 256
          %367 = vsyncadd %s357, %s366
          %s368 = smul.addr %s21, 2
          %s369 = sadd.s32 %s364, %s368
          %s370 = smul.addr %s369, 128
          %s371 = scalar_lea.hbm %s3, %s370
          %s372 = sshll.u32 %s360, 4
          %s373 = int_to_ptr.vmem [resolvable:$true] %s372
          %378 = dma.vmem_to_hbm [thread:$0]  %s373, 256, %s371, %s357, 128, 128, 8
        $region40: #{tpu_custom_call.1} parent=31 // pred_fallthru
          _
      $region32: #{tpu_custom_call.1} parent=5 // pred_fallthru
        _
      %p379 = scmp.le.s32.totalorder 2, %s12
      // Predicated region
      $region41: #{tpu_custom_call.1} parent=5 // pred_check
        %p380 = pneg %p379
      $region42: #{tpu_custom_call.1} parent=5 // pred_check_branch
        %382 = sbr.rel (%p380) target = $region44
      $region43: #{tpu_custom_call.1} parent=5 // pred_region
        %s383 = ssub.s32 %s12, 2
        // Predicated region
        $region45: #{tpu_custom_call.1} parent=43 // pred_check
          %p384 = pneg %p123
        $region46: #{tpu_custom_call.1} parent=43 // pred_check_branch
          %386 = sbr.rel (%p384) target = $region48
        $region47: #{tpu_custom_call.1} parent=43 // pred_region
          %s387 = sand.u32 %s108, 1
          %s388 = scalar_lea.sflag [#allocation4], %s387
          %s389 = sand.u32 %s108, 1
          %s390 = smul.addr %s389, 16
          %s391 = scalar_lea.vmem [#allocation3], %s390
          %392 = dma.done %s388, 256
        $region48: #{tpu_custom_call.1} parent=43 // pred_fallthru
          _
      $region44: #{tpu_custom_call.1} parent=5 // pred_fallthru
        _
    $region6: #{tpu_custom_call.1} parent=1 // loop_footer
      %s16 = sadd.s32 1, %s12
    $region7: #{tpu_custom_call.1} parent=1 // loop_footer_branch
      %11 = sbr.rel target = $region3
    $region8: #{tpu_custom_call.1} parent=1 // loop_exit
      _
    %393 = vsyncpa [#allocation4], 1
    %s394 = scalar_lea.sflag [#allocation4], 1
    %395 = vsyncpa %s394, 1

</llo_original>
